<compile_context>
chip_gen: v6e
topology: v6e:2x2x1
jax: 0.10.0
libtpu: 0.0.40
codegen_flags: <defaults>
</compile_context>

<pallas_src>
import jax
import jax.numpy as jnp
from jax.experimental import pallas as pl
from jax.experimental.pallas import tpu as pltpu

MAX_MU = 1.0
SIGMA_MIN = -5.0
SIGMA_MAX = 2.0


def _round_up(x, m):
    return ((x + m - 1) // m) * m


def _rcsl_gaussian_kernel(obs_ref, rtg_ref, w1o_ref, w1rb_ref, w2_ref, b2_ref,
                          wh_ref, bh_ref, out_ref):
    obs = obs_ref[...]                      # (TB, obs_dim)
    rtg = rtg_ref[...]                      # (TB, 1)

    w1_rtg = w1rb_ref[0:1, :]               # (1, H)  rtg column of W1
    b1 = w1rb_ref[1:2, :]                   # (1, H)  first-layer bias

    # Layer 1 (concat fused away): h = obs @ W1_obs + rtg * W1_rtg + b1
    h = jnp.dot(obs, w1o_ref[...], preferred_element_type=jnp.float32)
    h = h + rtg * w1_rtg + b1
    h = jnp.maximum(h, 0.0)

    # Layer 2
    h = jnp.dot(h, w2_ref[...], preferred_element_type=jnp.float32) + b2_ref[...]
    h = jnp.maximum(h, 0.0)

    # Fused DiagGaussian head: z = [mu_logits | log_sigma_logits], (TB, 2*A)
    z = jnp.dot(h, wh_ref[...], preferred_element_type=jnp.float32) + bh_ref[...]

    act_dim = out_ref.shape[1] // 2
    col = jax.lax.broadcasted_iota(jnp.int32, z.shape, 1)
    mu_full = MAX_MU * jnp.tanh(z)
    sigma_full = jnp.exp(jnp.clip(z, SIGMA_MIN, SIGMA_MAX))
    # Single lane-dense slab store: left half = mu, right half = sigma.
    out_ref[...] = jnp.where(col < act_dim, mu_full, sigma_full)


def rcsl_gaussian_forward(obs, rtg, kparams, *, block_rows=512):
    """obs: (B, obs_dim) f32; rtg: (B,) or (B, 1) f32. Returns (mu, sigma)."""
    obs = jnp.asarray(obs, jnp.float32)
    rtg = jnp.asarray(rtg, jnp.float32)
    if rtg.ndim == 1:
        rtg = rtg[:, None]

    B, obs_dim = obs.shape
    H = kparams["w2"].shape[0]
    two_act = kparams["wh"].shape[1]
    act_dim = two_act // 2

    # Batch tile: multiple of 8 rows, capped; pad batch to a whole number of tiles.
    TB = min(block_rows, _round_up(B, 8))
    Bp = _round_up(B, TB)
    if Bp != B:
        obs = jnp.pad(obs, ((0, Bp - B), (0, 0)))
        rtg = jnp.pad(rtg, ((0, Bp - B), (0, 0)))

    grid = (Bp // TB,)

    def resident(arr):
        # Whole-array block, same index on every grid step -> stays in VMEM.
        return pl.BlockSpec(arr.shape, lambda i: (0, 0))

    flops = 2 * Bp * (obs_dim * H + H + H * H + H * two_act)
    bytes_accessed = 4 * (
        Bp * obs_dim + Bp + Bp * two_act                      # activations in/out
        + obs_dim * H + 2 * H + H * H + H + H * two_act + two_act  # params
    )

    out = pl.pallas_call(
        _rcsl_gaussian_kernel,
        out_shape=jax.ShapeDtypeStruct((Bp, two_act), jnp.float32),
        grid=grid,
        in_specs=[
            pl.BlockSpec((TB, obs_dim), lambda i: (i, 0)),
            pl.BlockSpec((TB, 1), lambda i: (i, 0)),
            resident(kparams["w1_obs"]),
            resident(kparams["w1rb"]),
            resident(kparams["w2"]),
            resident(kparams["b2"]),
            resident(kparams["wh"]),
            resident(kparams["bh"]),
        ],
        out_specs=pl.BlockSpec((TB, two_act), lambda i: (i, 0)),
        compiler_params=pltpu.CompilerParams(
            dimension_semantics=("parallel",)),
        cost_estimate=pl.CostEstimate(
            flops=flops,
            transcendentals=2 * Bp * act_dim,
            bytes_accessed=bytes_accessed),
    )(obs, rtg,
      kparams["w1_obs"], kparams["w1rb"],
      kparams["w2"], kparams["b2"],
      kparams["wh"], kparams["bh"])

    out = out[:B]
    return out[:, :act_dim], out[:, act_dim:]


def make_params(key, in_dim, hidden_dim, act_dim):
    """PyTorch-layout synthetic parameters (weights as (in, out), biases (1, out))."""
    ks = jax.random.split(key, 8)

    def lin(kw, kb, fan_in, fan_out):
        lim = 1.0 / jnp.sqrt(fan_in)
        w = jax.random.uniform(kw, (fan_in, fan_out), jnp.float32, -lim, lim)
        b = jax.random.uniform(kb, (1, fan_out), jnp.float32, -lim, lim)
        return w, b

    w1, b1 = lin(ks[0], ks[1], in_dim, hidden_dim)
    w2, b2 = lin(ks[2], ks[3], hidden_dim, hidden_dim)
    wmu, bmu = lin(ks[4], ks[5], hidden_dim, act_dim)
    wsig, bsig = lin(ks[6], ks[7], hidden_dim, act_dim)
    return dict(w1=w1, b1=b1, w2=w2, b2=b2, wmu=wmu, bmu=bmu, wsig=wsig, bsig=bsig)


def pack_params(p, obs_dim):
    """Repack PyTorch-layout params into the fused kernel layout."""
    w1_obs = p["w1"][:obs_dim, :]                               # (obs_dim, H)
    w1_rtg = p["w1"][obs_dim:obs_dim + 1, :]                    # (1, H)
    w1rb = jnp.concatenate([w1_rtg, p["b1"]], axis=0)           # (2, H)
    wh = jnp.concatenate([p["wmu"], p["wsig"]], axis=1)         # (H, 2*A)
    bh = jnp.concatenate([p["bmu"], p["bsig"]], axis=1)         # (1, 2*A)
    return dict(w1_obs=w1_obs, w1rb=w1rb, w2=p["w2"], b2=p["b2"], wh=wh, bh=bh)


def _reference(obs, rtg, p):
    rtg = rtg[:, None] if rtg.ndim == 1 else rtg
    x = jnp.concatenate([obs, rtg], axis=-1)
    h = jnp.maximum(x @ p["w1"] + p["b1"], 0.0)
    h = jnp.maximum(h @ p["w2"] + p["b2"], 0.0)
    mu = MAX_MU * jnp.tanh(h @ p["wmu"] + p["bmu"])
    sigma = jnp.exp(jnp.clip(h @ p["wsig"] + p["bsig"], SIGMA_MIN, SIGMA_MAX))
    return mu, sigma


if __name__ == "__main__":
    key = jax.random.PRNGKey(0)
    k_obs, k_rtg, k_par, k_obs2, k_rtg2 = jax.random.split(key, 5)

    batch, obs_dim, hidden_dim, act_dim = 8, 11, 32, 4
    in_dim = obs_dim + 1  # obs concat rtg

    params = make_params(k_par, in_dim, hidden_dim, act_dim)
    kparams = pack_params(params, obs_dim)

    # Case 1: batch exactly a tile multiple.
    obs = jax.random.normal(k_obs, (batch, obs_dim), jnp.float32)
    rtg = jax.random.normal(k_rtg, (batch,), jnp.float32)
    mu, sigma = rcsl_gaussian_forward(obs, rtg, kparams)
    jax.block_until_ready((mu, sigma))
    mu_ref, sigma_ref = _reference(obs, rtg, params)
    assert jnp.allclose(mu, mu_ref, atol=1e-5, rtol=1e-5), "mu mismatch"
    assert jnp.allclose(sigma, sigma_ref, atol=1e-5, rtol=1e-5), "sigma mismatch"

    # Case 2: batch not divisible by 8 -> exercises pad/slice path.
    obs2 = jax.random.normal(k_obs2, (13, obs_dim), jnp.float32)
    rtg2 = jax.random.normal(k_rtg2, (13, 1), jnp.float32)
    mu2, sigma2 = rcsl_gaussian_forward(obs2, rtg2, kparams)
    jax.block_until_ready((mu2, sigma2))
    mu2_ref, sigma2_ref = _reference(obs2, rtg2, params)
    assert mu2.shape == (13, act_dim) and sigma2.shape == (13, act_dim)
    assert jnp.allclose(mu2, mu2_ref, atol=1e-5, rtol=1e-5), "mu mismatch (padded)"
    assert jnp.allclose(sigma2, sigma2_ref, atol=1e-5, rtol=1e-5), "sigma mismatch (padded)"

    print("KERNEL_OK")
</pallas_src>

<mosaic_0001>
module attributes {stable_mosaic.version = 11 : i64} {
  func.func @_rcsl_gaussian_kernel(%arg0: i32, %arg1: memref<8x11xf32, #tpu.memory_space<vmem>>, %arg2: memref<8x1xf32, #tpu.memory_space<vmem>>, %arg3: memref<11x32xf32, #tpu.memory_space<vmem>>, %arg4: memref<2x32xf32, #tpu.memory_space<vmem>>, %arg5: memref<32x32xf32, #tpu.memory_space<vmem>>, %arg6: memref<1x32xf32, #tpu.memory_space<vmem>>, %arg7: memref<32x8xf32, #tpu.memory_space<vmem>>, %arg8: memref<1x8xf32, #tpu.memory_space<vmem>>, %arg9: memref<8x8xf32, #tpu.memory_space<vmem>>) attributes {dimension_semantics = [#tpu.dimension_semantics<parallel>], iteration_bounds = array<i64: 1>, scalar_prefetch = 0 : i64, scratch_operands = 0 : i64, tpu.core_type = #tpu.core_type<tc>, window_params = [{transform_indices = @transform_0, window_bounds = array<i64: 8, 11>}, {transform_indices = @transform_1, window_bounds = array<i64: 8, 1>}, {pipeline_mode = #tpu.pipeline_mode<synchronous>, transform_indices = @transform_2, window_bounds = array<i64: 11, 32>}, {pipeline_mode = #tpu.pipeline_mode<synchronous>, transform_indices = @transform_3, window_bounds = array<i64: 2, 32>}, {pipeline_mode = #tpu.pipeline_mode<synchronous>, transform_indices = @transform_4, window_bounds = array<i64: 32, 32>}, {pipeline_mode = #tpu.pipeline_mode<synchronous>, transform_indices = @transform_5, window_bounds = array<i64: 1, 32>}, {pipeline_mode = #tpu.pipeline_mode<synchronous>, transform_indices = @transform_6, window_bounds = array<i64: 32, 8>}, {pipeline_mode = #tpu.pipeline_mode<synchronous>, transform_indices = @transform_7, window_bounds = array<i64: 1, 8>}, {transform_indices = @transform_8, window_bounds = array<i64: 8, 8>}]} {
    %c0 = arith.constant 0 : index
    %c0_0 = arith.constant 0 : index
    %0 = vector.load %arg1[%c0, %c0_0] : memref<8x11xf32, #tpu.memory_space<vmem>>, vector<8x11xf32>
    %c0_1 = arith.constant 0 : index
    %c0_2 = arith.constant 0 : index
    %1 = vector.load %arg2[%c0_1, %c0_2] : memref<8x1xf32, #tpu.memory_space<vmem>>, vector<8x1xf32>
    %c0_3 = arith.constant 0 : index
    %c0_4 = arith.constant 0 : index
    %2 = vector.load %arg4[%c0_3, %c0_4] : memref<2x32xf32, #tpu.memory_space<vmem>>, vector<1x32xf32>
    %c1 = arith.constant 1 : index
    %c0_5 = arith.constant 0 : index
    %3 = vector.load %arg4[%c1, %c0_5] : memref<2x32xf32, #tpu.memory_space<vmem>>, vector<1x32xf32>
    %c0_6 = arith.constant 0 : index
    %c0_7 = arith.constant 0 : index
    %4 = vector.load %arg3[%c0_6, %c0_7] : memref<11x32xf32, #tpu.memory_space<vmem>>, vector<11x32xf32>
    %cst = arith.constant dense<0.000000e+00> : vector<8x32xf32>
    %5 = tpu.matmul %0, %4, %cst {dimension_numbers = #tpu.dot_dimension_numbers<[1], [0], [0], [1], [0, 0, 1, 1], [], []>} : vector<8x11xf32>, vector<11x32xf32>, vector<8x32xf32> -> vector<8x32xf32>
    %6 = vector.broadcast %1 : vector<8x1xf32> to vector<8x32xf32>
    %7 = vector.broadcast %2 : vector<1x32xf32> to vector<8x32xf32>
    %8 = arith.mulf %6, %7 : vector<8x32xf32>
    %9 = arith.addf %5, %8 : vector<8x32xf32>
    %10 = vector.broadcast %3 : vector<1x32xf32> to vector<8x32xf32>
    %11 = arith.addf %9, %10 : vector<8x32xf32>
    %cst_8 = arith.constant 0.000000e+00 : f32
    %12 = vector.broadcast %cst_8 : f32 to vector<8x32xf32>
    %13 = arith.maximumf %11, %12 : vector<8x32xf32>
    %c0_9 = arith.constant 0 : index
    %c0_10 = arith.constant 0 : index
    %14 = vector.load %arg5[%c0_9, %c0_10] : memref<32x32xf32, #tpu.memory_space<vmem>>, vector<32x32xf32>
    %cst_11 = arith.constant dense<0.000000e+00> : vector<8x32xf32>
    %15 = tpu.matmul %13, %14, %cst_11 {dimension_numbers = #tpu.dot_dimension_numbers<[1], [0], [0], [1], [0, 0, 1, 1], [], []>} : vector<8x32xf32>, vector<32x32xf32>, vector<8x32xf32> -> vector<8x32xf32>
    %c0_12 = arith.constant 0 : index
    %c0_13 = arith.constant 0 : index
    %16 = vector.load %arg6[%c0_12, %c0_13] : memref<1x32xf32, #tpu.memory_space<vmem>>, vector<1x32xf32>
    %17 = vector.broadcast %16 : vector<1x32xf32> to vector<8x32xf32>
    %18 = arith.addf %15, %17 : vector<8x32xf32>
    %cst_14 = arith.constant 0.000000e+00 : f32
    %19 = vector.broadcast %cst_14 : f32 to vector<8x32xf32>
    %20 = arith.maximumf %18, %19 : vector<8x32xf32>
    %c0_15 = arith.constant 0 : index
    %c0_16 = arith.constant 0 : index
    %21 = vector.load %arg7[%c0_15, %c0_16] : memref<32x8xf32, #tpu.memory_space<vmem>>, vector<32x8xf32>
    %cst_17 = arith.constant dense<0.000000e+00> : vector<8x8xf32>
    %22 = tpu.matmul %20, %21, %cst_17 {dimension_numbers = #tpu.dot_dimension_numbers<[1], [0], [0], [1], [0, 0, 1, 1], [], []>} : vector<8x32xf32>, vector<32x8xf32>, vector<8x8xf32> -> vector<8x8xf32>
    %c0_18 = arith.constant 0 : index
    %c0_19 = arith.constant 0 : index
    %23 = vector.load %arg8[%c0_18, %c0_19] : memref<1x8xf32, #tpu.memory_space<vmem>>, vector<1x8xf32>
    %24 = vector.broadcast %23 : vector<1x8xf32> to vector<8x8xf32>
    %25 = arith.addf %22, %24 : vector<8x8xf32>
    %26 = tpu.iota {dimensions = array<i32: 1>} : vector<8x8xi32>
    %27 = math.tanh %25 : vector<8x8xf32>
    %cst_20 = arith.constant 1.000000e+00 : f32
    %28 = vector.broadcast %cst_20 : f32 to vector<8x8xf32>
    %29 = arith.mulf %28, %27 : vector<8x8xf32>
    %cst_21 = arith.constant -5.000000e+00 : f32
    %cst_22 = arith.constant 2.000000e+00 : f32
    %30 = vector.broadcast %cst_21 : f32 to vector<8x8xf32>
    %31 = arith.maximumf %30, %25 : vector<8x8xf32>
    %32 = vector.broadcast %cst_22 : f32 to vector<8x8xf32>
    %33 = arith.minimumf %32, %31 : vector<8x8xf32>
    %34 = math.exp %33 : vector<8x8xf32>
    %c4_i32 = arith.constant 4 : i32
    %35 = vector.broadcast %c4_i32 : i32 to vector<8x8xi32>
    %36 = arith.cmpi slt, %26, %35 : vector<8x8xi32>
    %37 = arith.select %36, %29, %34 : vector<8x8xi1>, vector<8x8xf32>
    %c0_23 = arith.constant 0 : index
    %c0_24 = arith.constant 0 : index
    %38 = vector.load %arg9[%c0_23, %c0_24] : memref<8x8xf32, #tpu.memory_space<vmem>>, vector<8x8xf32>
    tpu.vector_store %arg9[%c0_23, %c0_24], %37 {strides = array<i32>} : memref<8x8xf32, #tpu.memory_space<vmem>>, vector<8x8xf32>,
    return
  }
  func.func @transform_0(%arg0: i32) -> (i32, i32) {
    %c0_i32 = arith.constant 0 : i32
    %c0_i32_0 = arith.constant 0 : i32
    return %arg0, %c0_i32 : i32, i32
  }
  func.func @transform_1(%arg0: i32) -> (i32, i32) {
    %c0_i32 = arith.constant 0 : i32
    %c0_i32_0 = arith.constant 0 : i32
    return %arg0, %c0_i32 : i32, i32
  }
  func.func @transform_2(%arg0: i32) -> (i32, i32) {
    %c0_i32 = arith.constant 0 : i32
    %c0_i32_0 = arith.constant 0 : i32
    %c0_i32_1 = arith.constant 0 : i32
    return %c0_i32, %c0_i32_0 : i32, i32
  }
  func.func @transform_3(%arg0: i32) -> (i32, i32) {
    %c0_i32 = arith.constant 0 : i32
    %c0_i32_0 = arith.constant 0 : i32
    %c0_i32_1 = arith.constant 0 : i32
    return %c0_i32, %c0_i32_0 : i32, i32
  }
  func.func @transform_4(%arg0: i32) -> (i32, i32) {
    %c0_i32 = arith.constant 0 : i32
    %c0_i32_0 = arith.constant 0 : i32
    %c0_i32_1 = arith.constant 0 : i32
    return %c0_i32, %c0_i32_0 : i32, i32
  }
  func.func @transform_5(%arg0: i32) -> (i32, i32) {
    %c0_i32 = arith.constant 0 : i32
    %c0_i32_0 = arith.constant 0 : i32
    %c0_i32_1 = arith.constant 0 : i32
    return %c0_i32, %c0_i32_0 : i32, i32
  }
  func.func @transform_6(%arg0: i32) -> (i32, i32) {
    %c0_i32 = arith.constant 0 : i32
    %c0_i32_0 = arith.constant 0 : i32
    %c0_i32_1 = arith.constant 0 : i32
    return %c0_i32, %c0_i32_0 : i32, i32
  }
  func.func @transform_7(%arg0: i32) -> (i32, i32) {
    %c0_i32 = arith.constant 0 : i32
    %c0_i32_0 = arith.constant 0 : i32
    %c0_i32_1 = arith.constant 0 : i32
    return %c0_i32, %c0_i32_0 : i32, i32
  }
  func.func @transform_8(%arg0: i32) -> (i32, i32) {
    %c0_i32 = arith.constant 0 : i32
    %c0_i32_0 = arith.constant 0 : i32
    return %arg0, %c0_i32 : i32, i32
  }
}

</mosaic_0001>

<llo_original>
// kernel: tpu_custom_call.1
$region0: #{tpu_custom_call.1}
  #allocation0 [shape = 'u32[]', space=smem, size = 0x4, offset = 0x4, fixed_abs, tag = 'smem constant byte address 0x4 - core index']
  #allocation1 [shape = 'u32[144,128]{1,0:T(1,128)}', space=vmem, size = 0x12000, scoped, tag = 'internal scratch']
  %s0 = inlined_call_operand.hbm [shape: f32[8,11], index: 0, kind: input, shape index: {}]
  %s1 = inlined_call_operand.vmem [shape: f32[8,1], index: 1, kind: input, shape index: {}]
  %s2 = inlined_call_operand.vmem [shape: f32[11,32], index: 2, kind: input, shape index: {}]
  %s3 = inlined_call_operand.vmem [shape: f32[2,32], index: 3, kind: input, shape index: {}]
  %s4 = inlined_call_operand.vmem [shape: f32[32,32], index: 4, kind: input, shape index: {}]
  %s5 = inlined_call_operand.hbm [shape: f32[1,32], index: 5, kind: input, shape index: {}]
  %s6 = inlined_call_operand.vmem [shape: f32[32,8], index: 6, kind: input, shape index: {}]
  %s7 = inlined_call_operand.vmem [shape: f32[1,8], index: 7, kind: input, shape index: {}]
  %s8 = inlined_call_operand.hbm [shape: f32[8,8], index: 8, kind: output, shape index: {}]
  %s9 = sld [smem:[#allocation0]]
  $region50: #{tpu_custom_call.1} parent=0
    _
  %s11 = ssub.s32 1, %s9
  %s12 = scalar_select 0, %s11, %s9
  $region1: #{tpu_custom_call.1} parent=0
    #allocation2 [shape = 'u8[4096]{0}', space=vmem, size = 0x1000, scoped, tag = 'input window, operand 0, single buffered']
    #allocation3 [shape = 's32[1]{0}', space=sflag, size = 0x4, scoped, tag = 'scoped memory for tpu_custom_call.1']
    #allocation4 [shape = 's32[1]{0}', space=sflag, size = 0x4, scoped, tag = 'scoped memory for tpu_custom_call.1']
    #allocation5 [shape = 'u8[512]{0}', space=vmem, size = 0x400, scoped, tag = 'input window, operand 5, single buffered']
    #allocation6 [shape = 's32[1]{0}', space=sflag, size = 0x4, scoped, tag = 'scoped memory for tpu_custom_call.1']
    #allocation7 [shape = 'u8[4096]{0}', space=vmem, size = 0x1000, scoped, tag = 'output window, operand 0, single buffered']
    %13 = vsyncpa [#allocation3], 0
    %14 = vsyncpa [#allocation6], 0
    %15 = vsyncpa [#allocation4], 0
    // Predicated region
    $region2: #{tpu_custom_call.1} parent=1 // pred_check
      _
    $region3: #{tpu_custom_call.1} parent=1 // pred_check_branch
      %17 = sbr.rel (0) target = $region5
    $region4: #{tpu_custom_call.1} parent=1 // pred_region
      %s19 = ssub.s32 128, 128
      %20 = vsyncadd [#allocation3], %s19
      %s22 = sshll.u32 [#allocation2], 4
      %s23 = int_to_ptr.vmem [resolvable:$true] %s22
      %25 = dma.hbm_to_vmem [thread:$0]  %s0, 128, %s23, [#allocation3]
    $region5: #{tpu_custom_call.1} parent=1 // pred_fallthru
      _
    // Predicated region
    $region6: #{tpu_custom_call.1} parent=1 // pred_check
      _
    $region7: #{tpu_custom_call.1} parent=1 // pred_check_branch
      %27 = sbr.rel (0) target = $region9
    $region8: #{tpu_custom_call.1} parent=1 // pred_region
      _
    $region9: #{tpu_custom_call.1} parent=1 // pred_fallthru
      _
    // Predicated region
    $region10: #{tpu_custom_call.1} parent=1 // pred_check
      _
    $region11: #{tpu_custom_call.1} parent=1 // pred_check_branch
      %29 = sbr.rel (0) target = $region13
    $region12: #{tpu_custom_call.1} parent=1 // pred_region
      _
    $region13: #{tpu_custom_call.1} parent=1 // pred_fallthru
      _
    // Predicated region
    $region14: #{tpu_custom_call.1} parent=1 // pred_check
      _
    $region15: #{tpu_custom_call.1} parent=1 // pred_check_branch
      %31 = sbr.rel (0) target = $region17
    $region16: #{tpu_custom_call.1} parent=1 // pred_region
      _
    $region17: #{tpu_custom_call.1} parent=1 // pred_fallthru
      _
    // Predicated region
    $region18: #{tpu_custom_call.1} parent=1 // pred_check
      _
    $region19: #{tpu_custom_call.1} parent=1 // pred_check_branch
      %33 = sbr.rel (0) target = $region21
    $region20: #{tpu_custom_call.1} parent=1 // pred_region
      _
    $region21: #{tpu_custom_call.1} parent=1 // pred_fallthru
      _
    // Predicated region
    $region22: #{tpu_custom_call.1} parent=1 // pred_check
      _
    $region23: #{tpu_custom_call.1} parent=1 // pred_check_branch
      %35 = sbr.rel (0) target = $region25
    $region24: #{tpu_custom_call.1} parent=1 // pred_region
      %s37 = ssub.s32 16, 16
      %38 = vsyncadd [#allocation6], %s37
      %s40 = sshll.u32 [#allocation5], 4
      %s41 = int_to_ptr.vmem [resolvable:$true] %s40
      %43 = dma.hbm_to_vmem [thread:$0]  %s5, 16, %s41, [#allocation6]
    $region25: #{tpu_custom_call.1} parent=1 // pred_fallthru
      _
    // Predicated region
    $region26: #{tpu_custom_call.1} parent=1 // pred_check
      _
    $region27: #{tpu_custom_call.1} parent=1 // pred_check_branch
      %45 = sbr.rel (0) target = $region29
    $region28: #{tpu_custom_call.1} parent=1 // pred_region
      _
    $region29: #{tpu_custom_call.1} parent=1 // pred_fallthru
      _
    // Predicated region
    $region30: #{tpu_custom_call.1} parent=1 // pred_check
      _
    $region31: #{tpu_custom_call.1} parent=1 // pred_check_branch
      %47 = sbr.rel (0) target = $region33
    $region32: #{tpu_custom_call.1} parent=1 // pred_region
      _
    $region33: #{tpu_custom_call.1} parent=1 // pred_fallthru
      _
    // Predicated region
    $region34: #{tpu_custom_call.1} parent=1 // pred_check
      _
    $region35: #{tpu_custom_call.1} parent=1 // pred_check_branch
      %49 = sbr.rel (0) target = $region37
    $region36: #{tpu_custom_call.1} parent=1 // pred_region
      %50 = dma.done [#allocation3], 128
    $region37: #{tpu_custom_call.1} parent=1 // pred_fallthru
      _
    // Predicated region
    $region38: #{tpu_custom_call.1} parent=1 // pred_check
      _
    $region39: #{tpu_custom_call.1} parent=1 // pred_check_branch
      %52 = sbr.rel (0) target = $region41
    $region40: #{tpu_custom_call.1} parent=1 // pred_region
      %53 = dma.done [#allocation6], 16
    $region41: #{tpu_custom_call.1} parent=1 // pred_fallthru
      _
    %v54 = vld [vmem:[#allocation2] sm:$0xff]
    %v55 = vld [vmem:[%s1] sm:$0xff]
    %v56 = vld [vmem:[%s3] sm:$0x1]
    %v57 = vld [vmem:[%s3 + $0x1] sm:$0x1]
    %v58 = vld [vmem:[%s2] sm:$0xff]
    %v59 = vld [vmem:[%s2 + $0x8] sm:$0x7]
    %61 = vset.pattern.permute.xlu0 0
    %62 = vperm.xlu0 %61, %v55
    %v63 = vpop.permute.xlu0 %62
    %v65 = vlaneseq
    %v66 = vshrl.u32 %v65, 7
    %v67 = vsub.s32 0, %v66
    %v68 = vrot.slane %v56, %v67
    %v69 = vmul.f32 %v63, %v68
    %vm70 = vcmask 89088
    %v72 = vsel %vm70, %v54, 0
    %vm74 = vcmask 1042432
    %v76 = vsel %vm74, %v59, 0
    %78 = vmatprep.subr.mxu0 0.0
    %79 = vmatpush1.msra.mxu0 0.0
    %80 = vmatprep.subr.mxu0 0.0
    %81 = vmatpush1.msra.mxu0 0.0
    %82 = vmatprep.subr.mxu0 0.0
    %83 = vmatpush1.msra.mxu0 0.0
    %84 = vmatprep.subr.mxu0 0.0
    %85 = vmatpush1.msra.mxu0 0.0
    %86 = vmatprep.subr.mxu0 0.0
    %87 = vmatpush1.msra.mxu0 0.0
    %88 = vmatprep.subr.mxu0 0.0
    %89 = vmatpush1.msra.mxu0 0.0
    %90 = vmatprep.subr.mxu0 0.0
    %91 = vmatpush1.msra.mxu0 0.0
    %92 = vmatprep.subr.mxu0 0.0
    %93 = vmatpush1.msra.mxu0 0.0
    %94 = vmatprep.subr.mxu0 0.0
    %95 = vmatpush1.msra.mxu0 0.0
    %96 = vmatprep.subr.mxu0 0.0
    %97 = vmatpush1.msra.mxu0 0.0
    %98 = vmatprep.subr.mxu0 0.0
    %99 = vmatpush1.msra.mxu0 0.0
    %100 = vmatprep.subr.mxu0 0.0
    %101 = vmatpush1.msra.mxu0 0.0
    %102 = vmatprep.subr.mxu0 0.0
    %103 = vmatpush1.msra.mxu0 0.0
    %104 = vmatprep.subr.mxu0 0.0
    %105 = vmatpush1.msra.mxu0 0.0
    %106 = vmatprep.subr.mxu0 0.0
    %107 = vmatpush1.msra.mxu0 %v76
    %108 = vmatprep.subr.mxu0 0.0
    %109 = vmatpush1.msra.mxu0 %v58
    %110 = vmatprep.subr.mxu0 0.0
    %111 = vmatpush2.msra.mxu0 0.0
    %112 = vmatprep.subr.mxu0 0.0
    %113 = vmatpush2.msra.mxu0 0.0
    %114 = vmatprep.subr.mxu0 0.0
    %115 = vmatpush2.msra.mxu0 0.0
    %116 = vmatprep.subr.mxu0 0.0
    %117 = vmatpush2.msra.mxu0 0.0
    %118 = vmatprep.subr.mxu0 0.0
    %119 = vmatpush2.msra.mxu0 0.0
    %120 = vmatprep.subr.mxu0 0.0
    %121 = vmatpush2.msra.mxu0 0.0
    %122 = vmatprep.subr.mxu0 0.0
    %123 = vmatpush2.msra.mxu0 0.0
    %124 = vmatprep.subr.mxu0 0.0
    %125 = vmatpush2.msra.mxu0 0.0
    %126 = vmatprep.subr.mxu0 0.0
    %127 = vmatpush2.msra.mxu0 0.0
    %128 = vmatprep.subr.mxu0 0.0
    %129 = vmatpush2.msra.mxu0 0.0
    %130 = vmatprep.subr.mxu0 0.0
    %131 = vmatpush2.msra.mxu0 0.0
    %132 = vmatprep.subr.mxu0 0.0
    %133 = vmatpush2.msra.mxu0 0.0
    %134 = vmatprep.subr.mxu0 0.0
    %135 = vmatpush2.msra.mxu0 0.0
    %136 = vmatprep.subr.mxu0 0.0
    %137 = vmatpush2.msra.mxu0 0.0
    %138 = vmatprep.subr.mxu0 0.0
    %139 = vmatpush2.msra.mxu0 0.0
    %140 = vmatprep.subr.mxu0 0.0
    %141 = vmatpush2.msra.mxu0 0.0
    %142 = vmatprep.mubr.f32.mxu0 0.0
    %143 = vmatmul.mubr.f32.gmra.mxu0 %v72
    %v144 = vpop.f32.mrf.mxu0
    %v145 = vadd.f32 %v69, %v144
    %v146 = vpop.f32.mrf.mxu0
    %147 = vdwg.mxu0
    %v148 = vlaneseq
    %v149 = vshrl.u32 %v148, 7
    %v150 = vsub.s32 0, %v149
    %v151 = vrot.slane %v57, %v150
    %v152 = vadd.f32 %v145, %v151
    %v153 = vmax.f32 %v152, 0.0
    %v154 = vld [vmem:[%s4] sm:$0xff]
    %v155 = vld [vmem:[%s4 + $0x8] sm:$0xff]
    %v156 = vld [vmem:[%s4 + $0x10] sm:$0xff]
    %v157 = vld [vmem:[%s4 + $0x18] sm:$0xff]
    %v158 = vld [vmem:[#allocation5] sm:$0x1]
    %v160 = vlaneseq
    %v161 = vshrl.u32 %v160, 7
    %v162 = vsub.s32 0, %v161
    %v163 = vrot.slane %v158, %v162
    %vm165 = vcmask 261120
    %v167 = vsel %vm165, %v153, 0
    %169 = vmatprep.subr.mxu0 0.0
    %170 = vmatpush1.msra.mxu0 0.0
    %171 = vmatprep.subr.mxu0 0.0
    %172 = vmatpush1.msra.mxu0 0.0
    %173 = vmatprep.subr.mxu0 0.0
    %174 = vmatpush1.msra.mxu0 0.0
    %175 = vmatprep.subr.mxu0 0.0
    %176 = vmatpush1.msra.mxu0 0.0
    %177 = vmatprep.subr.mxu0 0.0
    %178 = vmatpush1.msra.mxu0 0.0
    %179 = vmatprep.subr.mxu0 0.0
    %180 = vmatpush1.msra.mxu0 0.0
    %181 = vmatprep.subr.mxu0 0.0
    %182 = vmatpush1.msra.mxu0 0.0
    %183 = vmatprep.subr.mxu0 0.0
    %184 = vmatpush1.msra.mxu0 0.0
    %185 = vmatprep.subr.mxu0 0.0
    %186 = vmatpush1.msra.mxu0 0.0
    %187 = vmatprep.subr.mxu0 0.0
    %188 = vmatpush1.msra.mxu0 0.0
    %189 = vmatprep.subr.mxu0 0.0
    %190 = vmatpush1.msra.mxu0 0.0
    %191 = vmatprep.subr.mxu0 0.0
    %192 = vmatpush1.msra.mxu0 0.0
    %193 = vmatprep.subr.mxu0 0.0
    %194 = vmatpush1.msra.mxu0 %v157
    %195 = vmatprep.subr.mxu0 0.0
    %196 = vmatpush1.msra.mxu0 %v156
    %197 = vmatprep.subr.mxu0 0.0
    %198 = vmatpush1.msra.mxu0 %v155
    %199 = vmatprep.subr.mxu0 0.0
    %200 = vmatpush1.msra.mxu0 %v154
    %201 = vmatprep.subr.mxu0 0.0
    %202 = vmatpush2.msra.mxu0 0.0
    %203 = vmatprep.subr.mxu0 0.0
    %204 = vmatpush2.msra.mxu0 0.0
    %205 = vmatprep.subr.mxu0 0.0
    %206 = vmatpush2.msra.mxu0 0.0
    %207 = vmatprep.subr.mxu0 0.0
    %208 = vmatpush2.msra.mxu0 0.0
    %209 = vmatprep.subr.mxu0 0.0
    %210 = vmatpush2.msra.mxu0 0.0
    %211 = vmatprep.subr.mxu0 0.0
    %212 = vmatpush2.msra.mxu0 0.0
    %213 = vmatprep.subr.mxu0 0.0
    %214 = vmatpush2.msra.mxu0 0.0
    %215 = vmatprep.subr.mxu0 0.0
    %216 = vmatpush2.msra.mxu0 0.0
    %217 = vmatprep.subr.mxu0 0.0
    %218 = vmatpush2.msra.mxu0 0.0
    %219 = vmatprep.subr.mxu0 0.0
    %220 = vmatpush2.msra.mxu0 0.0
    %221 = vmatprep.subr.mxu0 0.0
    %222 = vmatpush2.msra.mxu0 0.0
    %223 = vmatprep.subr.mxu0 0.0
    %224 = vmatpush2.msra.mxu0 0.0
    %225 = vmatprep.subr.mxu0 0.0
    %226 = vmatpush2.msra.mxu0 0.0
    %227 = vmatprep.subr.mxu0 0.0
    %228 = vmatpush2.msra.mxu0 0.0
    %229 = vmatprep.subr.mxu0 0.0
    %230 = vmatpush2.msra.mxu0 0.0
    %231 = vmatprep.subr.mxu0 0.0
    %232 = vmatpush2.msra.mxu0 0.0
    %233 = vmatprep.mubr.f32.mxu0 0.0
    %234 = vmatmul.mubr.f32.gmra.mxu0 %v167
    %v235 = vpop.f32.mrf.mxu0
    %v236 = vadd.f32 %v163, %v235
    %v237 = vpop.f32.mrf.mxu0
    %238 = vdwg.mxu0
    %v239 = vmax.f32 %v236, 0.0
    %v240 = vld [vmem:[%s6] sm:$0xff]
    %v241 = vld [vmem:[%s6 + $0x8] sm:$0xff]
    %v242 = vld [vmem:[%s6 + $0x10] sm:$0xff]
    %v243 = vld [vmem:[%s6 + $0x18] sm:$0xff]
    %v244 = vld [vmem:[%s7] sm:$0x1]
    %v246 = vlaneseq
    %v247 = vshrl.u32 %v246, 7
    %v248 = vsub.s32 0, %v247
    %v249 = vrot.slane %v244, %v248
    %v252 = vsel %vm165, %v239, 0
    %254 = vmatprep.subr.mxu0 0.0
    %255 = vmatpush1.msra.mxu0 0.0
    %256 = vmatprep.subr.mxu0 0.0
    %257 = vmatpush1.msra.mxu0 0.0
    %258 = vmatprep.subr.mxu0 0.0
    %259 = vmatpush1.msra.mxu0 0.0
    %260 = vmatprep.subr.mxu0 0.0
    %261 = vmatpush1.msra.mxu0 0.0
    %262 = vmatprep.subr.mxu0 0.0
    %263 = vmatpush1.msra.mxu0 0.0
    %264 = vmatprep.subr.mxu0 0.0
    %265 = vmatpush1.msra.mxu0 0.0
    %266 = vmatprep.subr.mxu0 0.0
    %267 = vmatpush1.msra.mxu0 0.0
    %268 = vmatprep.subr.mxu0 0.0
    %269 = vmatpush1.msra.mxu0 0.0
    %270 = vmatprep.subr.mxu0 0.0
    %271 = vmatpush1.msra.mxu0 0.0
    %272 = vmatprep.subr.mxu0 0.0
    %273 = vmatpush1.msra.mxu0 0.0
    %274 = vmatprep.subr.mxu0 0.0
    %275 = vmatpush1.msra.mxu0 0.0
    %276 = vmatprep.subr.mxu0 0.0
    %277 = vmatpush1.msra.mxu0 0.0
    %278 = vmatprep.subr.mxu0 0.0
    %279 = vmatpush1.msra.mxu0 %v243
    %280 = vmatprep.subr.mxu0 0.0
    %281 = vmatpush1.msra.mxu0 %v242
    %282 = vmatprep.subr.mxu0 0.0
    %283 = vmatpush1.msra.mxu0 %v241
    %284 = vmatprep.subr.mxu0 0.0
    %285 = vmatpush1.msra.mxu0 %v240
    %286 = vmatprep.subr.mxu0 0.0
    %287 = vmatpush2.msra.mxu0 0.0
    %288 = vmatprep.subr.mxu0 0.0
    %289 = vmatpush2.msra.mxu0 0.0
    %290 = vmatprep.subr.mxu0 0.0
    %291 = vmatpush2.msra.mxu0 0.0
    %292 = vmatprep.subr.mxu0 0.0
    %293 = vmatpush2.msra.mxu0 0.0
    %294 = vmatprep.subr.mxu0 0.0
    %295 = vmatpush2.msra.mxu0 0.0
    %296 = vmatprep.subr.mxu0 0.0
    %297 = vmatpush2.msra.mxu0 0.0
    %298 = vmatprep.subr.mxu0 0.0
    %299 = vmatpush2.msra.mxu0 0.0
    %300 = vmatprep.subr.mxu0 0.0
    %301 = vmatpush2.msra.mxu0 0.0
    %302 = vmatprep.subr.mxu0 0.0
    %303 = vmatpush2.msra.mxu0 0.0
    %304 = vmatprep.subr.mxu0 0.0
    %305 = vmatpush2.msra.mxu0 0.0
    %306 = vmatprep.subr.mxu0 0.0
    %307 = vmatpush2.msra.mxu0 0.0
    %308 = vmatprep.subr.mxu0 0.0
    %309 = vmatpush2.msra.mxu0 0.0
    %310 = vmatprep.subr.mxu0 0.0
    %311 = vmatpush2.msra.mxu0 0.0
    %312 = vmatprep.subr.mxu0 0.0
    %313 = vmatpush2.msra.mxu0 0.0
    %314 = vmatprep.subr.mxu0 0.0
    %315 = vmatpush2.msra.mxu0 0.0
    %316 = vmatprep.subr.mxu0 0.0
    %317 = vmatpush2.msra.mxu0 0.0
    %318 = vmatprep.mubr.f32.mxu0 0.0
    %319 = vmatmul.mubr.f32.gmra.mxu0 %v252
    %v320 = vpop.f32.mrf.mxu0
    %v321 = vadd.f32 %v249, %v320
    %v322 = vpop.f32.mrf.mxu0
    %323 = vdwg.mxu0
    %v324 = vlaneseq
    %v325 = vand.u32 %v324, 127
    %v326 = vtanh.pop %v321
    %v327 = vmax.f32 %v321, -5.0
    %v328 = vmin.f32 %v327, 2.0
    %v329 = vmul.f32 %v328, 1.442695
    %v330 = vpow.pop %v329
    %vm331 = vcmp.lt.s32.totalorder %v325, 4
    %v332 = vsel %vm331, %v326, %v330
    %vm333 = vcmask 64512
    %334 = vst.msk [vmem:[#allocation7] sm:$0xff] %vm333, %v332
    // Predicated region
    $region42: #{tpu_custom_call.1} parent=1 // pred_check
      _
    $region43: #{tpu_custom_call.1} parent=1 // pred_check_branch
      %336 = sbr.rel (0) target = $region45
    $region44: #{tpu_custom_call.1} parent=1 // pred_region
      %s338 = ssub.s32 128, 128
      %339 = vsyncadd [#allocation4], %s338
      %s341 = sshll.u32 [#allocation7], 4
      %s342 = int_to_ptr.vmem [resolvable:$true] %s341
      %344 = dma.vmem_to_hbm [thread:$0]  %s342, 128, %s8, [#allocation4]
    $region45: #{tpu_custom_call.1} parent=1 // pred_fallthru
      _
    // Predicated region
    $region46: #{tpu_custom_call.1} parent=1 // pred_check
      _
    $region47: #{tpu_custom_call.1} parent=1 // pred_check_branch
      %346 = sbr.rel (0) target = $region49
    $region48: #{tpu_custom_call.1} parent=1 // pred_region
      %347 = dma.done [#allocation4], 128
    $region49: #{tpu_custom_call.1} parent=1 // pred_fallthru
      _
    %348 = vsyncpa [#allocation3], 1
    %349 = vsyncpa [#allocation6], 1
    %350 = vsyncpa [#allocation4], 1

</llo_original>
